<compile_context>
chip_gen: v5e
topology: v5e:2x2
jax: 0.10.0
libtpu: 0.0.40
codegen_flags: <defaults>
</compile_context>

<pallas_src>
import jax
import jax.numpy as jnp
from jax.experimental import pallas as pl
from jax.experimental.pallas import tpu as pltpu


def _round_up(v, m):
    return ((v + m - 1) // m) * m


def _pad_to(x, shape):
    pads = [(0, s - d) for s, d in zip(shape, x.shape)]
    return jnp.pad(x, pads)


def pinsage_fused_kernel(a_ref, x_ref, w_ref, b_ref, o_ref, xin_ref):
    """Fused 2-layer hetero-SAGE. grid = (layer, relation).

    a_ref   : (1, Np, Np)        bf16  row-normalized adjacency of relation r
    x_ref   : (Np, Fp)           bf16  padded input node features (layer-0 input)
    w_ref   : (1, 1, 2*Fp, Fp)   bf16  [W_self; W_neigh] / R for (layer, relation)
    b_ref   : (1, 1, Fp)         f32   mean_r bias for this layer
    o_ref   : (Np, Fp)           f32   VMEM-resident accumulator / final output
    xin_ref : (Np, Fp)           bf16  scratch: current layer's input activations
    """
    layer = pl.program_id(0)
    r = pl.program_id(1)

    # --- layer init: load this layer's input, zero the accumulator ---------------
    @pl.when(jnp.logical_and(layer == 0, r == 0))
    def _():
        xin_ref[...] = x_ref[...]
        o_ref[...] = jnp.zeros_like(o_ref)

    @pl.when(jnp.logical_and(layer > 0, r == 0))
    def _():
        # layer-1 result (bias already applied) becomes the layer-2 input
        xin_ref[...] = o_ref[...].astype(xin_ref.dtype)
        o_ref[...] = jnp.zeros_like(o_ref)

    # --- per-relation body: one aggregation matmul + one fused weight matmul -----
    xin = xin_ref[...]                                           # (Np, Fp) bf16
    h_neigh = jnp.dot(a_ref[0], xin,
                      preferred_element_type=jnp.float32)        # (Np, Fp) f32
    cat = jnp.concatenate([xin, h_neigh.astype(jnp.bfloat16)], axis=-1)  # (Np, 2*Fp)
    o_ref[...] += jnp.dot(cat, w_ref[0, 0],
                          preferred_element_type=jnp.float32)    # 1/R already folded in

    # --- layer finalize: add the relation-averaged bias once ----------------------
    @pl.when(r == pl.num_programs(1) - 1)
    def _():
        o_ref[...] += b_ref[0]                                   # (1, Fp) broadcast


def pinsage_forward(a_norm, x, params, *, lane=128):
    """a_norm: [R,N,N] f32, x: [N,F_in] f32, weights [R,F_in,F_out], biases [R,F_out].

    Returns [N, out_features] f32 (two stacked HeteroGraphConv(SAGEConv-mean) layers).
    """
    R, N, _ = a_norm.shape
    F_in = x.shape[1]
    H = params["w_self_1"].shape[2]
    F_out = params["w_self_2"].shape[2]

    Np = _round_up(N, lane)                      # lane-dense adjacency & outputs
    Fp = _round_up(max(F_in, H, F_out), lane)    # single padded feature width for both layers

    a_p = _pad_to(a_norm, (R, Np, Np)).astype(jnp.bfloat16)
    x_p = _pad_to(x, (Np, Fp)).astype(jnp.bfloat16)

    def prep_layer(ws, wn, b):
        ws_p = _pad_to(ws, (R, Fp, Fp))
        wn_p = _pad_to(wn, (R, Fp, Fp))
        w_cat = jnp.concatenate([ws_p, wn_p], axis=1) * (1.0 / R)   # fold HeteroGraphConv mean
        b_mean = _pad_to(b.mean(axis=0), (Fp,))                     # mean_r b_r, added once
        return w_cat, b_mean

    w1, b1 = prep_layer(params["w_self_1"], params["w_neigh_1"], params["b_1"])
    w2, b2 = prep_layer(params["w_self_2"], params["w_neigh_2"], params["b_2"])
    w = jnp.stack([w1, w2]).astype(jnp.bfloat16)          # [2, R, 2*Fp, Fp]
    b = jnp.stack([b1, b2]).reshape(2, 1, Fp)             # [2, 1, Fp] f32

    cost = pl.CostEstimate(
        flops=2 * R * (2 * Np * Np * Fp + 4 * Np * Fp * Fp),
        transcendentals=0,
        bytes_accessed=(2 * a_p.size * 2 + x_p.size * 2 + w.size * 2
                        + b.size * 4 + Np * Fp * 4),
    )

    out = pl.pallas_call(
        pinsage_fused_kernel,
        out_shape=jax.ShapeDtypeStruct((Np, Fp), jnp.float32),
        grid_spec=pltpu.PrefetchScalarGridSpec(
            num_scalar_prefetch=0,
            grid=(2, R),                                    # (layer, relation)
            in_specs=[
                pl.BlockSpec((1, Np, Np), lambda l, r: (r, 0, 0)),       # A_r
                pl.BlockSpec((Np, Fp), lambda l, r: (0, 0)),             # X (resident)
                pl.BlockSpec((1, 1, 2 * Fp, Fp), lambda l, r: (l, r, 0, 0)),  # W cat
                pl.BlockSpec((1, 1, Fp), lambda l, r: (l, 0, 0)),        # mean bias
            ],
            out_specs=pl.BlockSpec((Np, Fp), lambda l, r: (0, 0)),       # resident accumulator
            scratch_shapes=[pltpu.VMEM((Np, Fp), jnp.bfloat16)],         # current layer input
        ),
        compiler_params=pltpu.CompilerParams(
            # layer axis carries state (hidden), relation axis is a reduction -> both arbitrary
            dimension_semantics=("arbitrary", "arbitrary"),
            vmem_limit_bytes=32 * 1024 * 1024,
        ),
        cost_estimate=cost,
    )(a_p, x_p, w, b)

    return out[:N, :F_out]


def _reference(a_norm, x, params):
    """Pure-JAX f32 reference for correctness checking."""
    def layer(x, ws, wn, b):
        h_neigh = jnp.einsum("rij,jf->rif", a_norm, x)
        out_r = (jnp.einsum("if,rfo->rio", x, ws)
                 + jnp.einsum("rif,rfo->rio", h_neigh, wn)
                 + b[:, None, :])
        return out_r.mean(axis=0)
    h = layer(x, params["w_self_1"], params["w_neigh_1"], params["b_1"])
    h = layer(h, params["w_self_2"], params["w_neigh_2"], params["b_2"])
    return h


if __name__ == "__main__":
    # Small synthetic heterograph: 1 node type, R relations, N nodes.
    N, R = 16, 2
    in_features, hidden_features, out_features = 8, 32, 16

    key = jax.random.PRNGKey(0)
    k_adj, k_x, k1, k2 = jax.random.split(key, 4)

    # Node features.
    x = jax.random.normal(k_x, (N, in_features), dtype=jnp.float32)

    # Dense adjacency per relation (dst x src), row-normalized (mean aggregation;
    # zero-in-degree rows stay zero, matching DGL's mean aggregator).
    adj = (jax.random.uniform(k_adj, (R, N, N)) < 0.3).astype(jnp.float32)
    deg = adj.sum(axis=-1, keepdims=True)
    a_norm = jnp.where(deg > 0, adj / jnp.maximum(deg, 1.0), 0.0)

    # Deterministic parameter init (SAGEConv: fc_self, fc_neigh per relation + bias),
    # weights stored as [R, F_in, F_out] (transposed vs. torch's (out, in)).
    def init(k, shape, scale=0.1):
        return scale * jax.random.normal(k, shape, dtype=jnp.float32)

    params = {
        "w_self_1":  init(jax.random.fold_in(k1, 0), (R, in_features, hidden_features)),
        "w_neigh_1": init(jax.random.fold_in(k1, 1), (R, in_features, hidden_features)),
        "b_1":       init(jax.random.fold_in(k1, 2), (R, hidden_features), 0.05),
        "w_self_2":  init(jax.random.fold_in(k2, 0), (R, hidden_features, out_features)),
        "w_neigh_2": init(jax.random.fold_in(k2, 1), (R, hidden_features, out_features)),
        "b_2":       init(jax.random.fold_in(k2, 2), (R, out_features), 0.05),
    }

    out = jax.block_until_ready(pinsage_forward(a_norm, x, params))
    ref = _reference(a_norm, x, params)

    assert out.shape == (N, out_features)
    max_err = float(jnp.max(jnp.abs(out - ref)))
    # bf16 matmul inputs with f32 accumulation -> loosened tolerance vs. f32 reference.
    assert jnp.allclose(out, ref, atol=2e-2, rtol=2e-2), f"mismatch vs. reference (max|err|={max_err})"

    print("KERNEL_OK")
</pallas_src>

<mosaic_0001>
module attributes {stable_mosaic.version = 11 : i64} {
  func.func @pinsage_fused_kernel(%arg0: i32, %arg1: i32, %arg2: memref<1x128x128xbf16, #tpu.memory_space<vmem>>, %arg3: memref<128x128xbf16, #tpu.memory_space<vmem>>, %arg4: memref<1x1x256x128xbf16, #tpu.memory_space<vmem>>, %arg5: memref<1x1x128xf32, #tpu.memory_space<vmem>>, %arg6: memref<128x128xf32, #tpu.memory_space<vmem>>, %arg7: memref<128x128xbf16, #tpu.memory_space<vmem>>) attributes {dimension_semantics = [#tpu.dimension_semantics<arbitrary>, #tpu.dimension_semantics<arbitrary>], iteration_bounds = array<i64: 2, 2>, scalar_prefetch = 0 : i64, scratch_operands = 1 : i64, tpu.core_type = #tpu.core_type<tc>, window_params = [{transform_indices = @transform_0, window_bounds = array<i64: 1, 128, 128>}, {pipeline_mode = #tpu.pipeline_mode<synchronous>, transform_indices = @transform_1, window_bounds = array<i64: 128, 128>}, {transform_indices = @transform_2, window_bounds = array<i64: 1, 1, 256, 128>}, {transform_indices = @transform_3, window_bounds = array<i64: 1, 1, 128>}, {pipeline_mode = #tpu.pipeline_mode<synchronous>, transform_indices = @transform_4, window_bounds = array<i64: 128, 128>}]} {
    %c0_i32 = arith.constant 0 : i32
    %0 = arith.cmpi eq, %arg0, %c0_i32 : i32
    %c0_i32_0 = arith.constant 0 : i32
    %1 = arith.cmpi eq, %arg1, %c0_i32_0 : i32
    %2 = arith.andi %0, %1 : i1
    %3 = arith.extui %2 : i1 to i32
    %c0_i32_1 = arith.constant 0 : i32
    %4 = arith.cmpi ne, %3, %c0_i32_1 : i32
    scf.if %4 {
      %c0_19 = arith.constant 0 : index
      %c0_20 = arith.constant 0 : index
      %25 = vector.load %arg3[%c0_19, %c0_20] : memref<128x128xbf16, #tpu.memory_space<vmem>>, vector<128x128xbf16>
      %c0_21 = arith.constant 0 : index
      %c0_22 = arith.constant 0 : index
      %26 = vector.load %arg7[%c0_21, %c0_22] : memref<128x128xbf16, #tpu.memory_space<vmem>>, vector<128x128xbf16>
      tpu.vector_store %arg7[%c0_21, %c0_22], %25 {strides = array<i32>} : memref<128x128xbf16, #tpu.memory_space<vmem>>, vector<128x128xbf16>,
      %cst_23 = arith.constant 0.000000e+00 : f32
      %27 = vector.broadcast %cst_23 : f32 to vector<128x128xf32>
      %c0_24 = arith.constant 0 : index
      %c0_25 = arith.constant 0 : index
      %28 = vector.load %arg6[%c0_24, %c0_25] : memref<128x128xf32, #tpu.memory_space<vmem>>, vector<128x128xf32>
      tpu.vector_store %arg6[%c0_24, %c0_25], %27 {strides = array<i32>} : memref<128x128xf32, #tpu.memory_space<vmem>>, vector<128x128xf32>,
    } else {
    }
    %c0_i32_2 = arith.constant 0 : i32
    %5 = arith.cmpi sgt, %arg0, %c0_i32_2 : i32
    %c0_i32_3 = arith.constant 0 : i32
    %6 = arith.cmpi eq, %arg1, %c0_i32_3 : i32
    %7 = arith.andi %5, %6 : i1
    %8 = arith.extui %7 : i1 to i32
    %c0_i32_4 = arith.constant 0 : i32
    %9 = arith.cmpi ne, %8, %c0_i32_4 : i32
    scf.if %9 {
      %c0_19 = arith.constant 0 : index
      %c0_20 = arith.constant 0 : index
      %25 = vector.load %arg6[%c0_19, %c0_20] : memref<128x128xf32, #tpu.memory_space<vmem>>, vector<128x128xf32>
      %26 = arith.truncf %25 : vector<128x128xf32> to vector<128x128xbf16>
      %c0_21 = arith.constant 0 : index
      %c0_22 = arith.constant 0 : index
      %27 = vector.load %arg7[%c0_21, %c0_22] : memref<128x128xbf16, #tpu.memory_space<vmem>>, vector<128x128xbf16>
      tpu.vector_store %arg7[%c0_21, %c0_22], %26 {strides = array<i32>} : memref<128x128xbf16, #tpu.memory_space<vmem>>, vector<128x128xbf16>,
      %cst_23 = arith.constant 0.000000e+00 : f32
      %28 = vector.broadcast %cst_23 : f32 to vector<128x128xf32>
      %c0_24 = arith.constant 0 : index
      %c0_25 = arith.constant 0 : index
      %29 = vector.load %arg6[%c0_24, %c0_25] : memref<128x128xf32, #tpu.memory_space<vmem>>, vector<128x128xf32>
      tpu.vector_store %arg6[%c0_24, %c0_25], %28 {strides = array<i32>} : memref<128x128xf32, #tpu.memory_space<vmem>>, vector<128x128xf32>,
    } else {
    }
    %c0 = arith.constant 0 : index
    %c0_5 = arith.constant 0 : index
    %10 = vector.load %arg7[%c0, %c0_5] : memref<128x128xbf16, #tpu.memory_space<vmem>>, vector<128x128xbf16>
    %c0_6 = arith.constant 0 : index
    %c0_7 = arith.constant 0 : index
    %c0_8 = arith.constant 0 : index
    %11 = vector.load %arg2[%c0_6, %c0_7, %c0_8] : memref<1x128x128xbf16, #tpu.memory_space<vmem>>, vector<1x128x128xbf16>
    %12 = vector.shape_cast %11 : vector<1x128x128xbf16> to vector<128x128xbf16>
    %cst = arith.constant dense<0.000000e+00> : vector<128x128xf32>
    %13 = tpu.matmul %12, %10, %cst {dimension_numbers = #tpu.dot_dimension_numbers<[1], [0], [0], [1], [0, 0, 1, 1], [], []>} : vector<128x128xbf16>, vector<128x128xbf16>, vector<128x128xf32> -> vector<128x128xf32>
    %14 = arith.truncf %13 : vector<128x128xf32> to vector<128x128xbf16>
    %15 = tpu.concatenate %10, %14 in 1 : vector<128x128xbf16>, vector<128x128xbf16> -> vector<128x256xbf16>
    %c0_9 = arith.constant 0 : index
    %c0_10 = arith.constant 0 : index
    %16 = vector.load %arg6[%c0_9, %c0_10] : memref<128x128xf32, #tpu.memory_space<vmem>>, vector<128x128xf32>
    %c0_11 = arith.constant 0 : index
    %c0_12 = arith.constant 0 : index
    %c0_13 = arith.constant 0 : index
    %c0_14 = arith.constant 0 : index
    %17 = vector.load %arg4[%c0_11, %c0_12, %c0_13, %c0_14] : memref<1x1x256x128xbf16, #tpu.memory_space<vmem>>, vector<1x1x256x128xbf16>
    %18 = vector.shape_cast %17 : vector<1x1x256x128xbf16> to vector<256x128xbf16>
    %cst_15 = arith.constant dense<0.000000e+00> : vector<128x128xf32>
    %19 = tpu.matmul %15, %18, %cst_15 {dimension_numbers = #tpu.dot_dimension_numbers<[1], [0], [0], [1], [0, 0, 1, 1], [], []>} : vector<128x256xbf16>, vector<256x128xbf16>, vector<128x128xf32> -> vector<128x128xf32>
    %20 = arith.addf %16, %19 : vector<128x128xf32>
    %c0_16 = arith.constant 0 : index
    %c0_17 = arith.constant 0 : index
    %21 = vector.load %arg6[%c0_16, %c0_17] : memref<128x128xf32, #tpu.memory_space<vmem>>, vector<128x128xf32>
    tpu.vector_store %arg6[%c0_16, %c0_17], %20 {strides = array<i32>} : memref<128x128xf32, #tpu.memory_space<vmem>>, vector<128x128xf32>,
    %c1_i32 = arith.constant 1 : i32
    %22 = arith.cmpi eq, %arg1, %c1_i32 : i32
    %23 = arith.extui %22 : i1 to i32
    %c0_i32_18 = arith.constant 0 : i32
    %24 = arith.cmpi ne, %23, %c0_i32_18 : i32
    scf.if %24 {
      %c0_19 = arith.constant 0 : index
      %c0_20 = arith.constant 0 : index
      %25 = vector.load %arg6[%c0_19, %c0_20] : memref<128x128xf32, #tpu.memory_space<vmem>>, vector<128x128xf32>
      %c0_21 = arith.constant 0 : index
      %c0_22 = arith.constant 0 : index
      %c0_23 = arith.constant 0 : index
      %26 = vector.load %arg5[%c0_21, %c0_22, %c0_23] : memref<1x1x128xf32, #tpu.memory_space<vmem>>, vector<1x1x128xf32>
      %27 = vector.shape_cast %26 : vector<1x1x128xf32> to vector<1x128xf32>
      %28 = vector.broadcast %27 : vector<1x128xf32> to vector<128x128xf32>
      %29 = arith.addf %25, %28 : vector<128x128xf32>
      %c0_24 = arith.constant 0 : index
      %c0_25 = arith.constant 0 : index
      %30 = vector.load %arg6[%c0_24, %c0_25] : memref<128x128xf32, #tpu.memory_space<vmem>>, vector<128x128xf32>
      tpu.vector_store %arg6[%c0_24, %c0_25], %29 {strides = array<i32>} : memref<128x128xf32, #tpu.memory_space<vmem>>, vector<128x128xf32>,
    } else {
    }
    return
  }
  func.func @transform_0(%arg0: i32, %arg1: i32) -> (i32, i32, i32) {
    %c0_i32 = arith.constant 0 : i32
    %c0_i32_0 = arith.constant 0 : i32
    %c0_i32_1 = arith.constant 0 : i32
    return %arg1, %c0_i32, %c0_i32_0 : i32, i32, i32
  }
  func.func @transform_1(%arg0: i32, %arg1: i32) -> (i32, i32) {
    %c0_i32 = arith.constant 0 : i32
    %c0_i32_0 = arith.constant 0 : i32
    %c0_i32_1 = arith.constant 0 : i32
    return %c0_i32, %c0_i32_0 : i32, i32
  }
  func.func @transform_2(%arg0: i32, %arg1: i32) -> (i32, i32, i32, i32) {
    %c0_i32 = arith.constant 0 : i32
    %c0_i32_0 = arith.constant 0 : i32
    %c0_i32_1 = arith.constant 0 : i32
    return %arg0, %arg1, %c0_i32, %c0_i32_0 : i32, i32, i32, i32
  }
  func.func @transform_3(%arg0: i32, %arg1: i32) -> (i32, i32, i32) {
    %c0_i32 = arith.constant 0 : i32
    %c0_i32_0 = arith.constant 0 : i32
    %c0_i32_1 = arith.constant 0 : i32
    return %arg0, %c0_i32, %c0_i32_0 : i32, i32, i32
  }
  func.func @transform_4(%arg0: i32, %arg1: i32) -> (i32, i32) {
    %c0_i32 = arith.constant 0 : i32
    %c0_i32_0 = arith.constant 0 : i32
    %c0_i32_1 = arith.constant 0 : i32
    return %c0_i32, %c0_i32_0 : i32, i32
  }
}

</mosaic_0001>

<llo_original>
// kernel: tpu_custom_call.1
$region0: #{tpu_custom_call.1}
  #allocation0 [shape = 'u32[]', space=smem, size = 0x4, offset = 0x4, fixed_abs, tag = 'smem constant byte address 0x4 - core index']
  #allocation1 [shape = 'u32[72,128]{1,0:T(1,128)}', space=vmem, size = 0x9000, scoped, tag = 'internal scratch']
  #allocation2 [shape = 'bf16[128,128]{1,0:T(8,128)(2,1)}', space=vmem, size = 0x8000, scoped, tag = 'scratch operand']
  %s0 = inlined_call_operand.hbm [shape: bf16[2,128,128], index: 0, kind: input, shape index: {}]
  %s1 = inlined_call_operand.hbm [shape: bf16[128,128], index: 1, kind: input, shape index: {}]
  %s2 = inlined_call_operand.hbm [shape: bf16[2,2,256,128], index: 2, kind: input, shape index: {}]
  %s3 = inlined_call_operand.vmem [shape: f32[2,1,128], index: 3, kind: input, shape index: {}]
  %s4 = inlined_call_operand.hbm [shape: f32[128,128], index: 4, kind: output, shape index: {}]
  %s5 = sld [smem:[#allocation0]]
  $region73: #{tpu_custom_call.1} parent=0
    _
  %s7 = ssub.s32 1, %s5
  %s8 = scalar_select 0, %s7, %s5
  $region1: #{tpu_custom_call.1} parent=0
    #allocation3 [shape = 'u8[65536]{0}', space=vmem, size = 0x10000, scoped, tag = 'input window, operand 0']
    #allocation4 [shape = 's32[2]{0}', space=sflag, size = 0x8, scoped, tag = 'scoped memory for tpu_custom_call.1']
    #allocation5 [shape = 's32[2]{0}', space=sflag, size = 0x8, scoped, tag = 'scoped memory for tpu_custom_call.1']
    #allocation6 [shape = 'u8[32768]{0}', space=vmem, size = 0x8000, scoped, tag = 'input window, operand 1, single buffered']
    #allocation7 [shape = 's32[1]{0}', space=sflag, size = 0x4, scoped, tag = 'scoped memory for tpu_custom_call.1']
    #allocation8 [shape = 'u8[131072]{0}', space=vmem, size = 0x20000, scoped, tag = 'input window, operand 2']
    #allocation9 [shape = 'u8[65536]{0}', space=vmem, size = 0x10000, scoped, tag = 'output window, operand 0, single buffered']
    %9 = vsyncpa [#allocation4], 0
    %s10 = scalar_lea.sflag [#allocation4], 1
    %11 = vsyncpa %s10, 0
    %12 = vsyncpa [#allocation7], 0
    %13 = vsyncpa [#allocation5], 0
    loop: start=0, step=1, limit=6
    $region2: #{tpu_custom_call.1} parent=1 // loop_pre_header
      _
    $region3: #{tpu_custom_call.1} parent=1 // loop_header
      %s15 = sphi 0, %s19
      %p16 = scmp.ge.s32.totalorder %s15, 6
      %s22 = sphi 0, %s34
      %s23 = sphi 0, %s30
      %s24 = sphi 0, %s22
      %s25 = sphi 0, %s23
      %s26 = sphi 0, %s24
      %s27 = sphi 0, %s25
      %s37 = sphi 0, %s39
      %s40 = sphi 0, %s37
      %s41 = sphi 0, %s40
      %s57 = sphi 0, %s41
      %s61 = sphi 0, %s61
      %s63 = sphi 0, %s61
      %s64 = sphi 0, %s63
      %s78 = sphi 0, %s64
      %s86 = sphi 0, %s88
      %s89 = sphi 0, %s86
      %s90 = sphi 0, %s89
      %s106 = sphi 0, %s90
      %s112 = sphi 0, %s114
      %s115 = sphi 0, %s112
      %s116 = sphi 0, %s115
      %s132 = sphi 0, %s116
      %s136 = sphi 0, %s136
      %s138 = sphi 0, %s136
      %s139 = sphi 0, %s138
      %s153 = sphi 0, %s139
    $region4: #{tpu_custom_call.1} parent=1 // loop_header_branch
      %18 = sbr.rel (%p16) target = $region8
    $region5: #{tpu_custom_call.1} parent=1 // loop_body
      %s20 = ssub.s32 %s15, 1
      %s21 = ssub.s32 %s15, 2
      %s28 = sadd.s32 1, %s23
      %p29 = scmp.ge.s32.totalorder %s28, 2
      %s30 = scalar_select %p29, 0, %s28
      %s31 = sadd.s32 1, %s22
      %s32 = scalar_select %p29, %s31, %s22
      %p33 = scmp.ge.s32.totalorder %s32, 2
      %s34 = scalar_select %p33, 0, %s32
      %s35 = ssub.s32 %s23, %s30
      %p36 = scmp.eq.s32.totalorder %s35, 0
      %s38 = sadd.s32 %s37, 1
      %s39 = scalar_select %p36, %s37, %s38
      %p42 = pneg %p36
      %p43 = scmp.eq.s32.totalorder %s15, 3
      %p44 = por %p42, %p43
      %p45 = scmp.ne.s32.totalorder %s37, %s40
      %p46 = scmp.eq.s32.totalorder %s15, 0
      %p47 = por %p45, %p46
      %p48 = scmp.ne.s32.totalorder %s37, %s40
      %p49 = scmp.eq.s32.totalorder %s20, 3
      %p50 = por %p48, %p49
      %p51 = scmp.ne.s32.totalorder %s40, %s41
      %p52 = scmp.eq.s32.totalorder %s20, 0
      %p53 = por %p51, %p52
      %p54 = scmp.ne.s32.totalorder %s40, %s41
      %p55 = scmp.eq.s32.totalorder %s21, 3
      %p56 = por %p54, %p55
      %p58 = scmp.ne.s32.totalorder %s41, %s57
      %p59 = scmp.eq.s32.totalorder %s21, 0
      %p60 = por %p58, %p59
      %s62 = sadd.s32 %s61, 1
      %p65 = scmp.eq.s32.totalorder %s15, 3
      %p66 = scmp.ne.s32.totalorder %s61, %s63
      %p67 = scmp.eq.s32.totalorder %s15, 0
      %p68 = por %p66, %p67
      %p69 = scmp.ne.s32.totalorder %s61, %s63
      %p70 = scmp.eq.s32.totalorder %s20, 3
      %p71 = por %p69, %p70
      %p72 = scmp.ne.s32.totalorder %s63, %s64
      %p73 = scmp.eq.s32.totalorder %s20, 0
      %p74 = por %p72, %p73
      %p75 = scmp.ne.s32.totalorder %s63, %s64
      %p76 = scmp.eq.s32.totalorder %s21, 3
      %p77 = por %p75, %p76
      %p79 = scmp.ne.s32.totalorder %s64, %s78
      %p80 = scmp.eq.s32.totalorder %s21, 0
      %p81 = por %p79, %p80
      %s82 = ssub.s32 %s22, %s34
      %s83 = ssub.s32 %s23, %s30
      %s84 = sor.u32 %s82, %s83
      %p85 = scmp.eq.s32.totalorder %s84, 0
      %s87 = sadd.s32 %s86, 1
      %s88 = scalar_select %p85, %s86, %s87
      %p91 = pneg %p85
      %p92 = scmp.eq.s32.totalorder %s15, 3
      %p93 = por %p91, %p92
      %p94 = scmp.ne.s32.totalorder %s86, %s89
      %p95 = scmp.eq.s32.totalorder %s15, 0
      %p96 = por %p94, %p95
      %p97 = scmp.ne.s32.totalorder %s86, %s89
      %p98 = scmp.eq.s32.totalorder %s20, 3
      %p99 = por %p97, %p98
      %p100 = scmp.ne.s32.totalorder %s89, %s90
      %p101 = scmp.eq.s32.totalorder %s20, 0
      %p102 = por %p100, %p101
      %p103 = scmp.ne.s32.totalorder %s89, %s90
      %p104 = scmp.eq.s32.totalorder %s21, 3
      %p105 = por %p103, %p104
      %p107 = scmp.ne.s32.totalorder %s90, %s106
      %p108 = scmp.eq.s32.totalorder %s21, 0
      %p109 = por %p107, %p108
      %s110 = ssub.s32 %s22, %s34
      %p111 = scmp.eq.s32.totalorder %s110, 0
      %s113 = sadd.s32 %s112, 1
      %s114 = scalar_select %p111, %s112, %s113
      %p117 = pneg %p111
      %p118 = scmp.eq.s32.totalorder %s15, 3
      %p119 = por %p117, %p118
      %p120 = scmp.ne.s32.totalorder %s112, %s115
      %p121 = scmp.eq.s32.totalorder %s15, 0
      %p122 = por %p120, %p121
      %p123 = scmp.ne.s32.totalorder %s112, %s115
      %p124 = scmp.eq.s32.totalorder %s20, 3
      %p125 = por %p123, %p124
      %p126 = scmp.ne.s32.totalorder %s115, %s116
      %p127 = scmp.eq.s32.totalorder %s20, 0
      %p128 = por %p126, %p127
      %p129 = scmp.ne.s32.totalorder %s115, %s116
      %p130 = scmp.eq.s32.totalorder %s21, 3
      %p131 = por %p129, %p130
      %p133 = scmp.ne.s32.totalorder %s116, %s132
      %p134 = scmp.eq.s32.totalorder %s21, 0
      %p135 = por %p133, %p134
      %s137 = sadd.s32 %s136, 1
      %p140 = scmp.eq.s32.totalorder %s15, 3
      %p141 = scmp.ne.s32.totalorder %s136, %s138
      %p142 = scmp.eq.s32.totalorder %s15, 0
      %p143 = por %p141, %p142
      %p144 = scmp.ne.s32.totalorder %s136, %s138
      %p145 = scmp.eq.s32.totalorder %s20, 3
      %p146 = por %p144, %p145
      %p147 = scmp.ne.s32.totalorder %s138, %s139
      %p148 = scmp.eq.s32.totalorder %s20, 0
      %p149 = por %p147, %p148
      %p150 = scmp.ne.s32.totalorder %s138, %s139
      %p151 = scmp.eq.s32.totalorder %s21, 3
      %p152 = por %p150, %p151
      %p154 = scmp.ne.s32.totalorder %s139, %s153
      %p155 = scmp.eq.s32.totalorder %s21, 0
      %p156 = por %p154, %p155
      %p157 = scmp.le.s32.totalorder 1, %s15
      %p158 = scmp.lt.s32.totalorder %s15, 5
      %p159 = pnand %p157, %p158
      %p160 = pneg %p159
      // Predicated region
      $region9: #{tpu_custom_call.1} parent=5 // pred_check
        _
      $region10: #{tpu_custom_call.1} parent=5 // pred_check_branch
        %162 = sbr.rel (%p159) target = $region12
      $region11: #{tpu_custom_call.1} parent=5 // pred_region
        %s163 = ssub.s32 %s15, 1
        // Predicated region
        $region13: #{tpu_custom_call.1} parent=11 // pred_check
          %p164 = pneg %p74
        $region14: #{tpu_custom_call.1} parent=11 // pred_check_branch
          %166 = sbr.rel (%p164) target = $region16
        $region15: #{tpu_custom_call.1} parent=11 // pred_region
          %168 = vsyncadd [#allocation7], 0
          %s169 = sshll.u32 %s1, 4
          %s170 = int_to_ptr.hbm [resolvable:$true] %s169
          %s171 = sshll.u32 [#allocation6], 4
          %s172 = int_to_ptr.vmem [resolvable:$true] %s171
          %177 = dma.hbm_to_vmem [thread:$0]  %s170, 1024, %s172, [#allocation7], 64, 64, 4
        $region16: #{tpu_custom_call.1} parent=11 // pred_fallthru
          _
      $region12: #{tpu_custom_call.1} parent=5 // pred_fallthru
        _
      %p178 = scmp.lt.s32.totalorder %s15, 4
      // Predicated region
      $region17: #{tpu_custom_call.1} parent=5 // pred_check
        %p179 = pneg %p178
      $region18: #{tpu_custom_call.1} parent=5 // pred_check_branch
        %181 = sbr.rel (%p179) target = $region20
      $region19: #{tpu_custom_call.1} parent=5 // pred_region
        // Predicated region
        $region21: #{tpu_custom_call.1} parent=19 // pred_check
          %p182 = pneg %p47
        $region22: #{tpu_custom_call.1} parent=19 // pred_check_branch
          %184 = sbr.rel (%p182) target = $region24
        $region23: #{tpu_custom_call.1} parent=19 // pred_region
          %s185 = sand.u32 %s15, 1
          %s186 = scalar_lea.sflag [#allocation4], %s185
          %s187 = sand.u32 %s37, 1
          %s188 = smul.addr %s187, 64
          %s189 = scalar_lea.vmem [#allocation3], %s188
          %191 = vsyncadd %s186, 0
          %s192 = smul.addr %s23, 16
          %s193 = smul.addr %s192, 4
          %s194 = scalar_lea.hbm %s0, %s193
          %s195 = sshll.u32 %s194, 4
          %s196 = int_to_ptr.hbm [resolvable:$true] %s195
          %s197 = sshll.u32 %s189, 4
          %s198 = int_to_ptr.vmem [resolvable:$true] %s197
          %203 = dma.hbm_to_vmem [thread:$0]  %s196, 1024, %s198, %s186, 64, 64, 4
        $region24: #{tpu_custom_call.1} parent=19 // pred_fallthru
          _
        // Predicated region
        $region25: #{tpu_custom_call.1} parent=19 // pred_check
          %p204 = pneg %p96
        $region26: #{tpu_custom_call.1} parent=19 // pred_check_branch
          %206 = sbr.rel (%p204) target = $region28
        $region27: #{tpu_custom_call.1} parent=19 // pred_region
          %s207 = sand.u32 %s15, 1
          %s208 = scalar_lea.sflag [#allocation4], %s207
          %s209 = sand.u32 %s86, 1
          %s210 = smul.addr %s209, 128
          %s211 = scalar_lea.vmem [#allocation8], %s210
          %213 = vsyncadd %s208, 0
          %s214 = smul.addr %s23, 32
          %s215 = smul.addr %s22, 64
          %s216 = sadd.s32 %s214, %s215
          %s217 = smul.addr %s216, 4
          %s218 = scalar_lea.hbm %s2, %s217
          %s219 = sshll.u32 %s218, 4
          %s220 = int_to_ptr.hbm [resolvable:$true] %s219
          %s221 = sshll.u32 %s211, 4
          %s222 = int_to_ptr.vmem [resolvable:$true] %s221
          %227 = dma.hbm_to_vmem [thread:$0]  %s220, 2048, %s222, %s208, 64, 64, 4
        $region28: #{tpu_custom_call.1} parent=19 // pred_fallthru
          _
        // Predicated region
        $region29: #{tpu_custom_call.1} parent=19 // pred_check
          %p228 = pneg %p122
        $region30: #{tpu_custom_call.1} parent=19 // pred_check_branch
          %230 = sbr.rel (%p228) target = $region32
        $region31: #{tpu_custom_call.1} parent=19 // pred_region
          %p231 = scmp.lt.s32.totalorder %s22, 1
          %s232 = scalar_select %p231, %s22, 1
          %s233 = scalar_lea.vmem %s3, %s232
        $region32: #{tpu_custom_call.1} parent=19 // pred_fallthru
          _
      $region20: #{tpu_custom_call.1} parent=5 // pred_fallthru
        _
      %p234 = scmp.le.s32.totalorder 1, %s15
      %p235 = scmp.lt.s32.totalorder %s15, 5
      %p236 = pnand %p234, %p235
      %p237 = pneg %p236
      // Predicated region
      $region33: #{tpu_custom_call.1} parent=5 // pred_check
        _
      $region34: #{tpu_custom_call.1} parent=5 // pred_check_branch
        %239 = sbr.rel (%p236) target = $region36
      $region35: #{tpu_custom_call.1} parent=5 // pred_region
        %s240 = ssub.s32 %s15, 1
        %s241 = sand.u32 %s20, 1
        %s242 = scalar_lea.sflag [#allocation4], %s241
        %s243 = sand.u32 %s40, 1
        %s244 = smul.addr %s243, 64
        %s245 = scalar_lea.vmem [#allocation3], %s244
        // Predicated region
        $region37: #{tpu_custom_call.1} parent=35 // pred_check
          %p246 = pneg %p53
        $region38: #{tpu_custom_call.1} parent=35 // pred_check_branch
          %248 = sbr.rel (%p246) target = $region40
        $region39: #{tpu_custom_call.1} parent=35 // pred_region
          %250 = dma.done %s242, 1024
        $region40: #{tpu_custom_call.1} parent=35 // pred_fallthru
          _
        // Predicated region
        $region41: #{tpu_custom_call.1} parent=35 // pred_check
          %p251 = pneg %p74
        $region42: #{tpu_custom_call.1} parent=35 // pred_check_branch
          %253 = sbr.rel (%p251) target = $region44
        $region43: #{tpu_custom_call.1} parent=35 // pred_region
          %255 = dma.done [#allocation7], 1024
        $region44: #{tpu_custom_call.1} parent=35 // pred_fallthru
          _
        %s256 = sand.u32 %s20, 1
        %s257 = scalar_lea.sflag [#allocation4], %s256
        %s258 = sand.u32 %s89, 1
        %s259 = smul.addr %s258, 128
        %s260 = scalar_lea.vmem [#allocation8], %s259
        // Predicated region
        $region45: #{tpu_custom_call.1} parent=35 // pred_check
          %p261 = pneg %p102
        $region46: #{tpu_custom_call.1} parent=35 // pred_check_branch
          %263 = sbr.rel (%p261) target = $region48
        $region47: #{tpu_custom_call.1} parent=35 // pred_region
          %265 = dma.done %s257, 2048
        $region48: #{tpu_custom_call.1} parent=35 // pred_fallthru
          _
        %s266 = sand.u32 %s20, 1
        %s267 = scalar_lea.sflag [#allocation4], %s266
        %s268 = sand.u32 %s40, 1
        %s269 = smul.addr %s268, 64
        %s270 = scalar_lea.vmem [#allocation3], %s269
        %p271 = pneg %p53
        %p272 = pneg %p50
        %p273 = pneg %p74
        %p274 = pneg %p71
        %s275 = sand.u32 %s20, 1
        %s276 = scalar_lea.sflag [#allocation4], %s275
        %s277 = sand.u32 %s89, 1
        %s278 = smul.addr %s277, 128
        %s279 = scalar_lea.vmem [#allocation8], %s278
        %p280 = pneg %p102
        %p281 = pneg %p99
        %p282 = scmp.lt.s32.totalorder %s24, 1
        %s283 = scalar_select %p282, %s24, 1
        %s284 = scalar_lea.vmem %s3, %s283
        %p285 = pneg %p128
        %p286 = pneg %p125
        %p287 = pneg %p149
        %p288 = pneg %p146
        %p289 = scmp.lt.s32.totalorder %s24, 1
        %s290 = scalar_select %p289, %s24, 1
        %s291 = scalar_lea.vmem %s3, %s290
        %p292 = scmp.eq.s32.totalorder %s24, 0
        %p293 = scmp.eq.s32.totalorder %s25, 0
        %p294 = pnand %p292, %p293
        %p295 = pneg %p294
        // Predicated region
        $region49: #{tpu_custom_call.1} parent=35 // pred_check
          _
        $region50: #{tpu_custom_call.1} parent=35 // pred_check_branch
          %297 = sbr.rel (%p294) target = $region52
        $region51: #{tpu_custom_call.1} parent=35 // pred_region
          %v298 = vld [vmem:[#allocation6] sm:$0xf]
          %v299 = vld [vmem:[#allocation6 + $0x4] sm:$0xf]
          %v300 = vld [vmem:[#allocation6 + $0x8] sm:$0xf]
          %v301 = vld [vmem:[#allocation6 + $0xc] sm:$0xf]
          %v302 = vld [vmem:[#allocation6 + $0x10] sm:$0xf]
          %v303 = vld [vmem:[#allocation6 + $0x14] sm:$0xf]
          %v304 = vld [vmem:[#allocation6 + $0x18] sm:$0xf]
          %v305 = vld [vmem:[#allocation6 + $0x1c] sm:$0xf]
          %v306 = vld [vmem:[#allocation6 + $0x20] sm:$0xf]
          %v307 = vld [vmem:[#allocation6 + $0x24] sm:$0xf]
          %v308 = vld [vmem:[#allocation6 + $0x28] sm:$0xf]
          %v309 = vld [vmem:[#allocation6 + $0x2c] sm:$0xf]
          %v310 = vld [vmem:[#allocation6 + $0x30] sm:$0xf]
          %v311 = vld [vmem:[#allocation6 + $0x34] sm:$0xf]
          %v312 = vld [vmem:[#allocation6 + $0x38] sm:$0xf]
          %v313 = vld [vmem:[#allocation6 + $0x3c] sm:$0xf]
          %314 = vst [vmem:[#allocation2] sm:$0xf] %v298
          %315 = vst [vmem:[#allocation2 + $0x4] sm:$0xf] %v299
          %316 = vst [vmem:[#allocation2 + $0x8] sm:$0xf] %v300
          %317 = vst [vmem:[#allocation2 + $0xc] sm:$0xf] %v301
          %318 = vst [vmem:[#allocation2 + $0x10] sm:$0xf] %v302
          %319 = vst [vmem:[#allocation2 + $0x14] sm:$0xf] %v303
          %320 = vst [vmem:[#allocation2 + $0x18] sm:$0xf] %v304
          %321 = vst [vmem:[#allocation2 + $0x1c] sm:$0xf] %v305
          %322 = vst [vmem:[#allocation2 + $0x20] sm:$0xf] %v306
          %323 = vst [vmem:[#allocation2 + $0x24] sm:$0xf] %v307
          %324 = vst [vmem:[#allocation2 + $0x28] sm:$0xf] %v308
          %325 = vst [vmem:[#allocation2 + $0x2c] sm:$0xf] %v309
          %326 = vst [vmem:[#allocation2 + $0x30] sm:$0xf] %v310
          %327 = vst [vmem:[#allocation2 + $0x34] sm:$0xf] %v311
          %328 = vst [vmem:[#allocation2 + $0x38] sm:$0xf] %v312
          %329 = vst [vmem:[#allocation2 + $0x3c] sm:$0xf] %v313
          %330 = vst [vmem:[#allocation9] sm:$0xff] 0.0
          %331 = vst [vmem:[#allocation9 + $0x8] sm:$0xff] 0.0
          %332 = vst [vmem:[#allocation9 + $0x10] sm:$0xff] 0.0
          %333 = vst [vmem:[#allocation9 + $0x18] sm:$0xff] 0.0
          %334 = vst [vmem:[#allocation9 + $0x20] sm:$0xff] 0.0
          %335 = vst [vmem:[#allocation9 + $0x28] sm:$0xff] 0.0
          %336 = vst [vmem:[#allocation9 + $0x30] sm:$0xff] 0.0
          %337 = vst [vmem:[#allocation9 + $0x38] sm:$0xff] 0.0
          %338 = vst [vmem:[#allocation9 + $0x40] sm:$0xff] 0.0
          %339 = vst [vmem:[#allocation9 + $0x48] sm:$0xff] 0.0
          %340 = vst [vmem:[#allocation9 + $0x50] sm:$0xff] 0.0
          %341 = vst [vmem:[#allocation9 + $0x58] sm:$0xff] 0.0
          %342 = vst [vmem:[#allocation9 + $0x60] sm:$0xff] 0.0
          %343 = vst [vmem:[#allocation9 + $0x68] sm:$0xff] 0.0
          %344 = vst [vmem:[#allocation9 + $0x70] sm:$0xff] 0.0
          %345 = vst [vmem:[#allocation9 + $0x78] sm:$0xff] 0.0
        $region52: #{tpu_custom_call.1} parent=35 // pred_fallthru
          _
        %p346 = scmp.gt.s32.totalorder %s24, 0
        %p347 = pnand %p346, %p293
        %p348 = pneg %p347
        // Predicated region
        $region53: #{tpu_custom_call.1} parent=35 // pred_check
          _
        $region54: #{tpu_custom_call.1} parent=35 // pred_check_branch
          %350 = sbr.rel (%p347) target = $region56
        $region55: #{tpu_custom_call.1} parent=35 // pred_region
          %v351 = vld [vmem:[#allocation9] sm:$0xff]
          %v352 = vld [vmem:[#allocation9 + $0x8] sm:$0xff]
          %v353 = vld [vmem:[#allocation9 + $0x10] sm:$0xff]
          %v354 = vld [vmem:[#allocation9 + $0x18] sm:$0xff]
          %v355 = vld [vmem:[#allocation9 + $0x20] sm:$0xff]
          %v356 = vld [vmem:[#allocation9 + $0x28] sm:$0xff]
          %v357 = vld [vmem:[#allocation9 + $0x30] sm:$0xff]
          %v358 = vld [vmem:[#allocation9 + $0x38] sm:$0xff]
          %v359 = vld [vmem:[#allocation9 + $0x40] sm:$0xff]
          %v360 = vld [vmem:[#allocation9 + $0x48] sm:$0xff]
          %v361 = vld [vmem:[#allocation9 + $0x50] sm:$0xff]
          %v362 = vld [vmem:[#allocation9 + $0x58] sm:$0xff]
          %v363 = vld [vmem:[#allocation9 + $0x60] sm:$0xff]
          %v364 = vld [vmem:[#allocation9 + $0x68] sm:$0xff]
          %v365 = vld [vmem:[#allocation9 + $0x70] sm:$0xff]
          %v366 = vld [vmem:[#allocation9 + $0x78] sm:$0xff]
          %v367 = vpack.c.bf16 %v351, %v351
          %v368 = vpack.c.bf16 %v352, %v352
          %v369 = vpack.c.bf16 %v353, %v353
          %v370 = vpack.c.bf16 %v354, %v354
          %v371 = vpack.c.bf16 %v355, %v355
          %v372 = vpack.c.bf16 %v356, %v356
          %v373 = vpack.c.bf16 %v357, %v357
          %v374 = vpack.c.bf16 %v358, %v358
          %v375 = vpack.c.bf16 %v359, %v359
          %v376 = vpack.c.bf16 %v360, %v360
          %v377 = vpack.c.bf16 %v361, %v361
          %v378 = vpack.c.bf16 %v362, %v362
          %v379 = vpack.c.bf16 %v363, %v363
          %v380 = vpack.c.bf16 %v364, %v364
          %v381 = vpack.c.bf16 %v365, %v365
          %v382 = vpack.c.bf16 %v366, %v366
          %383 = vst [vmem:[#allocation2] sm:$0xf] %v367
          %384 = vst [vmem:[#allocation2 + $0x4] sm:$0xf] %v368
          %385 = vst [vmem:[#allocation2 + $0x8] sm:$0xf] %v369
          %386 = vst [vmem:[#allocation2 + $0xc] sm:$0xf] %v370
          %387 = vst [vmem:[#allocation2 + $0x10] sm:$0xf] %v371
          %388 = vst [vmem:[#allocation2 + $0x14] sm:$0xf] %v372
          %389 = vst [vmem:[#allocation2 + $0x18] sm:$0xf] %v373
          %390 = vst [vmem:[#allocation2 + $0x1c] sm:$0xf] %v374
          %391 = vst [vmem:[#allocation2 + $0x20] sm:$0xf] %v375
          %392 = vst [vmem:[#allocation2 + $0x24] sm:$0xf] %v376
          %393 = vst [vmem:[#allocation2 + $0x28] sm:$0xf] %v377
          %394 = vst [vmem:[#allocation2 + $0x2c] sm:$0xf] %v378
          %395 = vst [vmem:[#allocation2 + $0x30] sm:$0xf] %v379
          %396 = vst [vmem:[#allocation2 + $0x34] sm:$0xf] %v380
          %397 = vst [vmem:[#allocation2 + $0x38] sm:$0xf] %v381
          %398 = vst [vmem:[#allocation2 + $0x3c] sm:$0xf] %v382
          %399 = vst [vmem:[#allocation9] sm:$0xff] 0.0
          %400 = vst [vmem:[#allocation9 + $0x8] sm:$0xff] 0.0
          %401 = vst [vmem:[#allocation9 + $0x10] sm:$0xff] 0.0
          %402 = vst [vmem:[#allocation9 + $0x18] sm:$0xff] 0.0
          %403 = vst [vmem:[#allocation9 + $0x20] sm:$0xff] 0.0
          %404 = vst [vmem:[#allocation9 + $0x28] sm:$0xff] 0.0
          %405 = vst [vmem:[#allocation9 + $0x30] sm:$0xff] 0.0
          %406 = vst [vmem:[#allocation9 + $0x38] sm:$0xff] 0.0
          %407 = vst [vmem:[#allocation9 + $0x40] sm:$0xff] 0.0
          %408 = vst [vmem:[#allocation9 + $0x48] sm:$0xff] 0.0
          %409 = vst [vmem:[#allocation9 + $0x50] sm:$0xff] 0.0
          %410 = vst [vmem:[#allocation9 + $0x58] sm:$0xff] 0.0
          %411 = vst [vmem:[#allocation9 + $0x60] sm:$0xff] 0.0
          %412 = vst [vmem:[#allocation9 + $0x68] sm:$0xff] 0.0
          %413 = vst [vmem:[#allocation9 + $0x70] sm:$0xff] 0.0
          %414 = vst [vmem:[#allocation9 + $0x78] sm:$0xff] 0.0
        $region56: #{tpu_custom_call.1} parent=35 // pred_fallthru
          _
        %v415 = vld [vmem:[#allocation2] sm:$0xf]
        %v416 = vld [vmem:[#allocation2 + $0x4] sm:$0xf]
        %v417 = vld [vmem:[#allocation2 + $0x8] sm:$0xf]
        %v418 = vld [vmem:[#allocation2 + $0xc] sm:$0xf]
        %v419 = vld [vmem:[#allocation2 + $0x10] sm:$0xf]
        %v420 = vld [vmem:[#allocation2 + $0x14] sm:$0xf]
        %v421 = vld [vmem:[#allocation2 + $0x18] sm:$0xf]
        %v422 = vld [vmem:[#allocation2 + $0x1c] sm:$0xf]
        %v423 = vld [vmem:[#allocation2 + $0x20] sm:$0xf]
        %v424 = vld [vmem:[#allocation2 + $0x24] sm:$0xf]
        %v425 = vld [vmem:[#allocation2 + $0x28] sm:$0xf]
        %v426 = vld [vmem:[#allocation2 + $0x2c] sm:$0xf]
        %v427 = vld [vmem:[#allocation2 + $0x30] sm:$0xf]
        %v428 = vld [vmem:[#allocation2 + $0x34] sm:$0xf]
        %v429 = vld [vmem:[#allocation2 + $0x38] sm:$0xf]
        %v430 = vld [vmem:[#allocation2 + $0x3c] sm:$0xf]
        %v431 = vld [vmem:[%s245] sm:$0xf]
        %v432 = vld [vmem:[%s245 + $0x4] sm:$0xf]
        %v433 = vld [vmem:[%s245 + $0x8] sm:$0xf]
        %v434 = vld [vmem:[%s245 + $0xc] sm:$0xf]
        %v435 = vld [vmem:[%s245 + $0x10] sm:$0xf]
        %v436 = vld [vmem:[%s245 + $0x14] sm:$0xf]
        %v437 = vld [vmem:[%s245 + $0x18] sm:$0xf]
        %v438 = vld [vmem:[%s245 + $0x1c] sm:$0xf]
        %v439 = vld [vmem:[%s245 + $0x20] sm:$0xf]
        %v440 = vld [vmem:[%s245 + $0x24] sm:$0xf]
        %v441 = vld [vmem:[%s245 + $0x28] sm:$0xf]
        %v442 = vld [vmem:[%s245 + $0x2c] sm:$0xf]
        %v443 = vld [vmem:[%s245 + $0x30] sm:$0xf]
        %v444 = vld [vmem:[%s245 + $0x34] sm:$0xf]
        %v445 = vld [vmem:[%s245 + $0x38] sm:$0xf]
        %v446 = vld [vmem:[%s245 + $0x3c] sm:$0xf]
        %v463 = vunpack.c.l.b16 %v431
        %v464 = vunpack.c.l.b16 %v432
        %v465 = vunpack.c.l.b16 %v433
        %v466 = vunpack.c.l.b16 %v434
        %v467 = vunpack.c.l.b16 %v435
        %v468 = vunpack.c.l.b16 %v436
        %v469 = vunpack.c.l.b16 %v437
        %v470 = vunpack.c.l.b16 %v438
        %v471 = vunpack.c.l.b16 %v439
        %v472 = vunpack.c.l.b16 %v440
        %v473 = vunpack.c.l.b16 %v441
        %v474 = vunpack.c.l.b16 %v442
        %v475 = vunpack.c.l.b16 %v443
        %v476 = vunpack.c.l.b16 %v444
        %v477 = vunpack.c.l.b16 %v445
        %v478 = vunpack.c.l.b16 %v446
        %v479 = vpack.c.b16 %v464, %v463
        %v480 = vpack.c.b16 %v466, %v465
        %v481 = vpack.c.b16 %v468, %v467
        %v482 = vpack.c.b16 %v470, %v469
        %v483 = vpack.c.b16 %v472, %v471
        %v484 = vpack.c.b16 %v474, %v473
        %v485 = vpack.c.b16 %v476, %v475
        %v486 = vpack.c.b16 %v478, %v477
        %v511 = vunpack.c.l.b16 %v415
        %v512 = vunpack.c.l.b16 %v416
        %v513 = vunpack.c.l.b16 %v417
        %v514 = vunpack.c.l.b16 %v418
        %v515 = vunpack.c.l.b16 %v419
        %v516 = vunpack.c.l.b16 %v420
        %v517 = vunpack.c.l.b16 %v421
        %v518 = vunpack.c.l.b16 %v422
        %v519 = vunpack.c.l.b16 %v423
        %v520 = vunpack.c.l.b16 %v424
        %v521 = vunpack.c.l.b16 %v425
        %v522 = vunpack.c.l.b16 %v426
        %v523 = vunpack.c.l.b16 %v427
        %v524 = vunpack.c.l.b16 %v428
        %v525 = vunpack.c.l.b16 %v429
        %v526 = vunpack.c.l.b16 %v430
        %v527 = vpack.c.b16 %v512, %v511
        %v528 = vpack.c.b16 %v514, %v513
        %v529 = vpack.c.b16 %v516, %v515
        %v530 = vpack.c.b16 %v518, %v517
        %v531 = vpack.c.b16 %v520, %v519
        %v532 = vpack.c.b16 %v522, %v521
        %v533 = vpack.c.b16 %v524, %v523
        %v534 = vpack.c.b16 %v526, %v525
        %543 = vmatpush.bf16.msra.mxu0 %v534
        %544 = vmatpush.bf16.msra.mxu0 %v533
        %545 = vmatpush.bf16.msra.mxu0 %v532
        %546 = vmatpush.bf16.msra.mxu0 %v531
        %547 = vmatpush.bf16.msra.mxu0 %v530
        %548 = vmatpush.bf16.msra.mxu0 %v529
        %549 = vmatpush.bf16.msra.mxu0 %v528
        %550 = vmatpush.bf16.msra.mxu0 %v527
        %551 = vmatmul.bf16.gmra.mxu0 %v479
        %v552 = vpop.f32.mrf.mxu0
        %v553 = vadd.f32 0.0, %v552
        %v554 = vpop.f32.mrf.mxu0
        %v555 = vadd.f32 0.0, %v554
        %556 = vmatmul.bf16.gmra.mxu0 %v480
        %v557 = vpop.f32.mrf.mxu0
        %v558 = vadd.f32 0.0, %v557
        %v559 = vpop.f32.mrf.mxu0
        %v560 = vadd.f32 0.0, %v559
        %561 = vmatmul.bf16.gmra.mxu0 %v481
        %v562 = vpop.f32.mrf.mxu0
        %v563 = vadd.f32 0.0, %v562
        %v564 = vpop.f32.mrf.mxu0
        %v565 = vadd.f32 0.0, %v564
        %566 = vmatmul.bf16.gmra.mxu0 %v482
        %v567 = vpop.f32.mrf.mxu0
        %v568 = vadd.f32 0.0, %v567
        %v569 = vpop.f32.mrf.mxu0
        %v570 = vadd.f32 0.0, %v569
        %571 = vmatmul.bf16.gmra.mxu0 %v483
        %v572 = vpop.f32.mrf.mxu0
        %v573 = vadd.f32 0.0, %v572
        %v574 = vpop.f32.mrf.mxu0
        %v575 = vadd.f32 0.0, %v574
        %576 = vmatmul.bf16.gmra.mxu0 %v484
        %v577 = vpop.f32.mrf.mxu0
        %v578 = vadd.f32 0.0, %v577
        %v579 = vpop.f32.mrf.mxu0
        %v580 = vadd.f32 0.0, %v579
        %581 = vmatmul.bf16.gmra.mxu0 %v485
        %v582 = vpop.f32.mrf.mxu0
        %v583 = vadd.f32 0.0, %v582
        %v584 = vpop.f32.mrf.mxu0
        %v585 = vadd.f32 0.0, %v584
        %586 = vmatmul.bf16.gmra.mxu0 %v486
        %v587 = vpop.f32.mrf.mxu0
        %v588 = vadd.f32 0.0, %v587
        %v589 = vpop.f32.mrf.mxu0
        %v590 = vadd.f32 0.0, %v589
        %591 = vdwg.mxu0
        %v592 = vpack.c.bf16 %v553, %v553
        %v593 = vpack.c.bf16 %v555, %v555
        %v594 = vpack.c.bf16 %v558, %v558
        %v595 = vpack.c.bf16 %v560, %v560
        %v596 = vpack.c.bf16 %v563, %v563
        %v597 = vpack.c.bf16 %v565, %v565
        %v598 = vpack.c.bf16 %v568, %v568
        %v599 = vpack.c.bf16 %v570, %v570
        %v600 = vpack.c.bf16 %v573, %v573
        %v601 = vpack.c.bf16 %v575, %v575
        %v602 = vpack.c.bf16 %v578, %v578
        %v603 = vpack.c.bf16 %v580, %v580
        %v604 = vpack.c.bf16 %v583, %v583
        %v605 = vpack.c.bf16 %v585, %v585
        %v606 = vpack.c.bf16 %v588, %v588
        %v607 = vpack.c.bf16 %v590, %v590
        %v624 = vunpack.c.l.b16 %v592
        %v625 = vunpack.c.l.b16 %v593
        %v626 = vunpack.c.l.b16 %v594
        %v627 = vunpack.c.l.b16 %v595
        %v628 = vunpack.c.l.b16 %v596
        %v629 = vunpack.c.l.b16 %v597
        %v630 = vunpack.c.l.b16 %v598
        %v631 = vunpack.c.l.b16 %v599
        %v632 = vunpack.c.l.b16 %v600
        %v633 = vunpack.c.l.b16 %v601
        %v634 = vunpack.c.l.b16 %v602
        %v635 = vunpack.c.l.b16 %v603
        %v636 = vunpack.c.l.b16 %v604
        %v637 = vunpack.c.l.b16 %v605
        %v638 = vunpack.c.l.b16 %v606
        %v639 = vunpack.c.l.b16 %v607
        %v640 = vpack.c.b16 %v625, %v624
        %v641 = vpack.c.b16 %v627, %v626
        %v642 = vpack.c.b16 %v629, %v628
        %v643 = vpack.c.b16 %v631, %v630
        %v644 = vpack.c.b16 %v633, %v632
        %v645 = vpack.c.b16 %v635, %v634
        %v646 = vpack.c.b16 %v637, %v636
        %v647 = vpack.c.b16 %v639, %v638
        %v656 = vld [vmem:[#allocation9] sm:$0xff]
        %v657 = vld [vmem:[#allocation9 + $0x8] sm:$0xff]
        %v658 = vld [vmem:[#allocation9 + $0x10] sm:$0xff]
        %v659 = vld [vmem:[#allocation9 + $0x18] sm:$0xff]
        %v660 = vld [vmem:[#allocation9 + $0x20] sm:$0xff]
        %v661 = vld [vmem:[#allocation9 + $0x28] sm:$0xff]
        %v662 = vld [vmem:[#allocation9 + $0x30] sm:$0xff]
        %v663 = vld [vmem:[#allocation9 + $0x38] sm:$0xff]
        %v664 = vld [vmem:[#allocation9 + $0x40] sm:$0xff]
        %v665 = vld [vmem:[#allocation9 + $0x48] sm:$0xff]
        %v666 = vld [vmem:[#allocation9 + $0x50] sm:$0xff]
        %v667 = vld [vmem:[#allocation9 + $0x58] sm:$0xff]
        %v668 = vld [vmem:[#allocation9 + $0x60] sm:$0xff]
        %v669 = vld [vmem:[#allocation9 + $0x68] sm:$0xff]
        %v670 = vld [vmem:[#allocation9 + $0x70] sm:$0xff]
        %v671 = vld [vmem:[#allocation9 + $0x78] sm:$0xff]
        %v672 = vld [vmem:[%s260] sm:$0xf]
        %v673 = vld [vmem:[%s260 + $0x4] sm:$0xf]
        %v674 = vld [vmem:[%s260 + $0x8] sm:$0xf]
        %v675 = vld [vmem:[%s260 + $0xc] sm:$0xf]
        %v676 = vld [vmem:[%s260 + $0x10] sm:$0xf]
        %v677 = vld [vmem:[%s260 + $0x14] sm:$0xf]
        %v678 = vld [vmem:[%s260 + $0x18] sm:$0xf]
        %v679 = vld [vmem:[%s260 + $0x1c] sm:$0xf]
        %v680 = vld [vmem:[%s260 + $0x20] sm:$0xf]
        %v681 = vld [vmem:[%s260 + $0x24] sm:$0xf]
        %v682 = vld [vmem:[%s260 + $0x28] sm:$0xf]
        %v683 = vld [vmem:[%s260 + $0x2c] sm:$0xf]
        %v684 = vld [vmem:[%s260 + $0x30] sm:$0xf]
        %v685 = vld [vmem:[%s260 + $0x34] sm:$0xf]
        %v686 = vld [vmem:[%s260 + $0x38] sm:$0xf]
        %v687 = vld [vmem:[%s260 + $0x3c] sm:$0xf]
        %v688 = vld [vmem:[%s260 + $0x40] sm:$0xf]
        %v689 = vld [vmem:[%s260 + $0x44] sm:$0xf]
        %v690 = vld [vmem:[%s260 + $0x48] sm:$0xf]
        %v691 = vld [vmem:[%s260 + $0x4c] sm:$0xf]
        %v692 = vld [vmem:[%s260 + $0x50] sm:$0xf]
        %v693 = vld [vmem:[%s260 + $0x54] sm:$0xf]
        %v694 = vld [vmem:[%s260 + $0x58] sm:$0xf]
        %v695 = vld [vmem:[%s260 + $0x5c] sm:$0xf]
        %v696 = vld [vmem:[%s260 + $0x60] sm:$0xf]
        %v697 = vld [vmem:[%s260 + $0x64] sm:$0xf]
        %v698 = vld [vmem:[%s260 + $0x68] sm:$0xf]
        %v699 = vld [vmem:[%s260 + $0x6c] sm:$0xf]
        %v700 = vld [vmem:[%s260 + $0x70] sm:$0xf]
        %v701 = vld [vmem:[%s260 + $0x74] sm:$0xf]
        %v702 = vld [vmem:[%s260 + $0x78] sm:$0xf]
        %v703 = vld [vmem:[%s260 + $0x7c] sm:$0xf]
        %v736 = vunpack.c.l.b16 %v672
        %v737 = vunpack.c.l.b16 %v673
        %v738 = vunpack.c.l.b16 %v674
        %v739 = vunpack.c.l.b16 %v675
        %v740 = vunpack.c.l.b16 %v676
        %v741 = vunpack.c.l.b16 %v677
        %v742 = vunpack.c.l.b16 %v678
        %v743 = vunpack.c.l.b16 %v679
        %v744 = vunpack.c.l.b16 %v680
        %v745 = vunpack.c.l.b16 %v681
        %v746 = vunpack.c.l.b16 %v682
        %v747 = vunpack.c.l.b16 %v683
        %v748 = vunpack.c.l.b16 %v684
        %v749 = vunpack.c.l.b16 %v685
        %v750 = vunpack.c.l.b16 %v686
        %v751 = vunpack.c.l.b16 %v687
        %v752 = vunpack.c.l.b16 %v688
        %v753 = vunpack.c.l.b16 %v689
        %v754 = vunpack.c.l.b16 %v690
        %v755 = vunpack.c.l.b16 %v691
        %v756 = vunpack.c.l.b16 %v692
        %v757 = vunpack.c.l.b16 %v693
        %v758 = vunpack.c.l.b16 %v694
        %v759 = vunpack.c.l.b16 %v695
        %v760 = vunpack.c.l.b16 %v696
        %v761 = vunpack.c.l.b16 %v697
        %v762 = vunpack.c.l.b16 %v698
        %v763 = vunpack.c.l.b16 %v699
        %v764 = vunpack.c.l.b16 %v700
        %v765 = vunpack.c.l.b16 %v701
        %v766 = vunpack.c.l.b16 %v702
        %v767 = vunpack.c.l.b16 %v703
        %v768 = vpack.c.b16 %v737, %v736
        %v769 = vpack.c.b16 %v739, %v738
        %v770 = vpack.c.b16 %v741, %v740
        %v771 = vpack.c.b16 %v743, %v742
        %v772 = vpack.c.b16 %v745, %v744
        %v773 = vpack.c.b16 %v747, %v746
        %v774 = vpack.c.b16 %v749, %v748
        %v775 = vpack.c.b16 %v751, %v750
        %v776 = vpack.c.b16 %v753, %v752
        %v777 = vpack.c.b16 %v755, %v754
        %v778 = vpack.c.b16 %v757, %v756
        %v779 = vpack.c.b16 %v759, %v758
        %v780 = vpack.c.b16 %v761, %v760
        %v781 = vpack.c.b16 %v763, %v762
        %v782 = vpack.c.b16 %v765, %v764
        %v783 = vpack.c.b16 %v767, %v766
        %800 = vmatpush.bf16.msra.mxu0 %v775
        %801 = vmatpush.bf16.msra.mxu0 %v774
        %802 = vmatpush.bf16.msra.mxu0 %v773
        %803 = vmatpush.bf16.msra.mxu0 %v772
        %804 = vmatpush.bf16.msra.mxu0 %v771
        %805 = vmatpush.bf16.msra.mxu0 %v770
        %806 = vmatpush.bf16.msra.mxu0 %v769
        %807 = vmatpush.bf16.msra.mxu0 %v768
        %808 = vmatmul.bf16.gmra.mxu0 %v527
        %v809 = vpop.f32.mrf.mxu0
        %v810 = vadd.f32 0.0, %v809
        %v811 = vpop.f32.mrf.mxu0
        %v812 = vadd.f32 0.0, %v811
        %813 = vmatmul.bf16.gmra.mxu0 %v528
        %v814 = vpop.f32.mrf.mxu0
        %v815 = vadd.f32 0.0, %v814
        %v816 = vpop.f32.mrf.mxu0
        %v817 = vadd.f32 0.0, %v816
        %818 = vmatmul.bf16.gmra.mxu0 %v529
        %v819 = vpop.f32.mrf.mxu0
        %v820 = vadd.f32 0.0, %v819
        %v821 = vpop.f32.mrf.mxu0
        %v822 = vadd.f32 0.0, %v821
        %823 = vmatmul.bf16.gmra.mxu0 %v530
        %v824 = vpop.f32.mrf.mxu0
        %v825 = vadd.f32 0.0, %v824
        %v826 = vpop.f32.mrf.mxu0
        %v827 = vadd.f32 0.0, %v826
        %828 = vmatmul.bf16.gmra.mxu0 %v531
        %v829 = vpop.f32.mrf.mxu0
        %v830 = vadd.f32 0.0, %v829
        %v831 = vpop.f32.mrf.mxu0
        %v832 = vadd.f32 0.0, %v831
        %833 = vmatmul.bf16.gmra.mxu0 %v532
        %v834 = vpop.f32.mrf.mxu0
        %v835 = vadd.f32 0.0, %v834
        %v836 = vpop.f32.mrf.mxu0
        %v837 = vadd.f32 0.0, %v836
        %838 = vmatmul.bf16.gmra.mxu0 %v533
        %v839 = vpop.f32.mrf.mxu0
        %v840 = vadd.f32 0.0, %v839
        %v841 = vpop.f32.mrf.mxu0
        %v842 = vadd.f32 0.0, %v841
        %843 = vmatmul.bf16.gmra.mxu0 %v534
        %v844 = vpop.f32.mrf.mxu0
        %v845 = vadd.f32 0.0, %v844
        %v846 = vpop.f32.mrf.mxu0
        %v847 = vadd.f32 0.0, %v846
        %848 = vdwg.mxu0
        %849 = vmatpush.bf16.msra.mxu0 %v783
        %850 = vmatpush.bf16.msra.mxu0 %v782
        %851 = vmatpush.bf16.msra.mxu0 %v781
        %852 = vmatpush.bf16.msra.mxu0 %v780
        %853 = vmatpush.bf16.msra.mxu0 %v779
        %854 = vmatpush.bf16.msra.mxu0 %v778
        %855 = vmatpush.bf16.msra.mxu0 %v777
        %856 = vmatpush.bf16.msra.mxu0 %v776
        %857 = vmatmul.bf16.gmra.mxu0 %v640
        %v858 = vpop.f32.mrf.mxu0
        %v859 = vadd.f32 %v810, %v858
        %v860 = vpop.f32.mrf.mxu0
        %v861 = vadd.f32 %v812, %v860
        %862 = vmatmul.bf16.gmra.mxu0 %v641
        %v863 = vpop.f32.mrf.mxu0
        %v864 = vadd.f32 %v815, %v863
        %v865 = vpop.f32.mrf.mxu0
        %v866 = vadd.f32 %v817, %v865
        %867 = vmatmul.bf16.gmra.mxu0 %v642
        %v868 = vpop.f32.mrf.mxu0
        %v869 = vadd.f32 %v820, %v868
        %v870 = vpop.f32.mrf.mxu0
        %v871 = vadd.f32 %v822, %v870
        %872 = vmatmul.bf16.gmra.mxu0 %v643
        %v873 = vpop.f32.mrf.mxu0
        %v874 = vadd.f32 %v825, %v873
        %v875 = vpop.f32.mrf.mxu0
        %v876 = vadd.f32 %v827, %v875
        %877 = vmatmul.bf16.gmra.mxu0 %v644
        %v878 = vpop.f32.mrf.mxu0
        %v879 = vadd.f32 %v830, %v878
        %v880 = vpop.f32.mrf.mxu0
        %v881 = vadd.f32 %v832, %v880
        %882 = vmatmul.bf16.gmra.mxu0 %v645
        %v883 = vpop.f32.mrf.mxu0
        %v884 = vadd.f32 %v835, %v883
        %v885 = vpop.f32.mrf.mxu0
        %v886 = vadd.f32 %v837, %v885
        %887 = vmatmul.bf16.gmra.mxu0 %v646
        %v888 = vpop.f32.mrf.mxu0
        %v889 = vadd.f32 %v840, %v888
        %v890 = vpop.f32.mrf.mxu0
        %v891 = vadd.f32 %v842, %v890
        %892 = vmatmul.bf16.gmra.mxu0 %v647
        %v893 = vpop.f32.mrf.mxu0
        %v894 = vadd.f32 %v845, %v893
        %v895 = vpop.f32.mrf.mxu0
        %v896 = vadd.f32 %v847, %v895
        %897 = vdwg.mxu0
        %v898 = vadd.f32 %v656, %v859
        %v899 = vadd.f32 %v657, %v861
        %v900 = vadd.f32 %v658, %v864
        %v901 = vadd.f32 %v659, %v866
        %v902 = vadd.f32 %v660, %v869
        %v903 = vadd.f32 %v661, %v871
        %v904 = vadd.f32 %v662, %v874
        %v905 = vadd.f32 %v663, %v876
        %v906 = vadd.f32 %v664, %v879
        %v907 = vadd.f32 %v665, %v881
        %v908 = vadd.f32 %v666, %v884
        %v909 = vadd.f32 %v667, %v886
        %v910 = vadd.f32 %v668, %v889
        %v911 = vadd.f32 %v669, %v891
        %v912 = vadd.f32 %v670, %v894
        %v913 = vadd.f32 %v671, %v896
        %914 = vst [vmem:[#allocation9] sm:$0xff] %v898
        %915 = vst [vmem:[#allocation9 + $0x8] sm:$0xff] %v899
        %916 = vst [vmem:[#allocation9 + $0x10] sm:$0xff] %v900
        %917 = vst [vmem:[#allocation9 + $0x18] sm:$0xff] %v901
        %918 = vst [vmem:[#allocation9 + $0x20] sm:$0xff] %v902
        %919 = vst [vmem:[#allocation9 + $0x28] sm:$0xff] %v903
        %920 = vst [vmem:[#allocation9 + $0x30] sm:$0xff] %v904
        %921 = vst [vmem:[#allocation9 + $0x38] sm:$0xff] %v905
        %922 = vst [vmem:[#allocation9 + $0x40] sm:$0xff] %v906
        %923 = vst [vmem:[#allocation9 + $0x48] sm:$0xff] %v907
        %924 = vst [vmem:[#allocation9 + $0x50] sm:$0xff] %v908
        %925 = vst [vmem:[#allocation9 + $0x58] sm:$0xff] %v909
        %926 = vst [vmem:[#allocation9 + $0x60] sm:$0xff] %v910
        %927 = vst [vmem:[#allocation9 + $0x68] sm:$0xff] %v911
        %928 = vst [vmem:[#allocation9 + $0x70] sm:$0xff] %v912
        %929 = vst [vmem:[#allocation9 + $0x78] sm:$0xff] %v913
        %p930 = scmp.eq.s32.totalorder %s25, 1
        // Predicated region
        $region57: #{tpu_custom_call.1} parent=35 // pred_check
          %p931 = pneg %p930
        $region58: #{tpu_custom_call.1} parent=35 // pred_check_branch
          %933 = sbr.rel (%p931) target = $region60
        $region59: #{tpu_custom_call.1} parent=35 // pred_region
          %v934 = vld [vmem:[#allocation9] sm:$0xff]
          %v935 = vld [vmem:[#allocation9 + $0x8] sm:$0xff]
          %v936 = vld [vmem:[#allocation9 + $0x10] sm:$0xff]
          %v937 = vld [vmem:[#allocation9 + $0x18] sm:$0xff]
          %v938 = vld [vmem:[#allocation9 + $0x20] sm:$0xff]
          %v939 = vld [vmem:[#allocation9 + $0x28] sm:$0xff]
          %v940 = vld [vmem:[#allocation9 + $0x30] sm:$0xff]
          %v941 = vld [vmem:[#allocation9 + $0x38] sm:$0xff]
          %v942 = vld [vmem:[#allocation9 + $0x40] sm:$0xff]
          %v943 = vld [vmem:[#allocation9 + $0x48] sm:$0xff]
          %v944 = vld [vmem:[#allocation9 + $0x50] sm:$0xff]
          %v945 = vld [vmem:[#allocation9 + $0x58] sm:$0xff]
          %v946 = vld [vmem:[#allocation9 + $0x60] sm:$0xff]
          %v947 = vld [vmem:[#allocation9 + $0x68] sm:$0xff]
          %v948 = vld [vmem:[#allocation9 + $0x70] sm:$0xff]
          %v949 = vld [vmem:[#allocation9 + $0x78] sm:$0xff]
          %v950 = vld [vmem:[%s291] sm:$0x1]
          %v952 = vperm.slane %v950, 0
          %v954 = vadd.f32 %v934, %v952
          %v955 = vadd.f32 %v935, %v952
          %v956 = vadd.f32 %v936, %v952
          %v957 = vadd.f32 %v937, %v952
          %v958 = vadd.f32 %v938, %v952
          %v959 = vadd.f32 %v939, %v952
          %v960 = vadd.f32 %v940, %v952
          %v961 = vadd.f32 %v941, %v952
          %v962 = vadd.f32 %v942, %v952
          %v963 = vadd.f32 %v943, %v952
          %v964 = vadd.f32 %v944, %v952
          %v965 = vadd.f32 %v945, %v952
          %v966 = vadd.f32 %v946, %v952
          %v967 = vadd.f32 %v947, %v952
          %v968 = vadd.f32 %v948, %v952
          %v969 = vadd.f32 %v949, %v952
          %970 = vst [vmem:[#allocation9] sm:$0xff] %v954
          %971 = vst [vmem:[#allocation9 + $0x8] sm:$0xff] %v955
          %972 = vst [vmem:[#allocation9 + $0x10] sm:$0xff] %v956
          %973 = vst [vmem:[#allocation9 + $0x18] sm:$0xff] %v957
          %974 = vst [vmem:[#allocation9 + $0x20] sm:$0xff] %v958
          %975 = vst [vmem:[#allocation9 + $0x28] sm:$0xff] %v959
          %976 = vst [vmem:[#allocation9 + $0x30] sm:$0xff] %v960
          %977 = vst [vmem:[#allocation9 + $0x38] sm:$0xff] %v961
          %978 = vst [vmem:[#allocation9 + $0x40] sm:$0xff] %v962
          %979 = vst [vmem:[#allocation9 + $0x48] sm:$0xff] %v963
          %980 = vst [vmem:[#allocation9 + $0x50] sm:$0xff] %v964
          %981 = vst [vmem:[#allocation9 + $0x58] sm:$0xff] %v965
          %982 = vst [vmem:[#allocation9 + $0x60] sm:$0xff] %v966
          %983 = vst [vmem:[#allocation9 + $0x68] sm:$0xff] %v967
          %984 = vst [vmem:[#allocation9 + $0x70] sm:$0xff] %v968
          %985 = vst [vmem:[#allocation9 + $0x78] sm:$0xff] %v969
        $region60: #{tpu_custom_call.1} parent=35 // pred_fallthru
          _
        // Predicated region
        $region61: #{tpu_custom_call.1} parent=35 // pred_check
          %p986 = pneg %p146
        $region62: #{tpu_custom_call.1} parent=35 // pred_check_branch
          %988 = sbr.rel (%p986) target = $region64
        $region63: #{tpu_custom_call.1} parent=35 // pred_region
          %990 = vsyncadd [#allocation5], 0
          %s991 = sshll.u32 [#allocation9], 4
          %s992 = int_to_ptr.vmem [resolvable:$true] %s991
          %s993 = sshll.u32 %s4, 4
          %s994 = int_to_ptr.hbm [resolvable:$true] %s993
          %999 = dma.vmem_to_hbm [thread:$0]  %s992, 2048, %s994, [#allocation5], 128, 128, 8
        $region64: #{tpu_custom_call.1} parent=35 // pred_fallthru
          _
        // Predicated region
        $region65: #{tpu_custom_call.1} parent=35 // pred_check
          %p1000 = pneg %p146
        $region66: #{tpu_custom_call.1} parent=35 // pred_check_branch
          %1002 = sbr.rel (%p1000) target = $region68
        $region67: #{tpu_custom_call.1} parent=35 // pred_region
          %1004 = dma.done [#allocation5], 2048
        $region68: #{tpu_custom_call.1} parent=35 // pred_fallthru
          _
      $region36: #{tpu_custom_call.1} parent=5 // pred_fallthru
        _
      %p1005 = scmp.le.s32.totalorder 2, %s15
      // Predicated region
      $region69: #{tpu_custom_call.1} parent=5 // pred_check
        %p1006 = pneg %p1005
      $region70: #{tpu_custom_call.1} parent=5 // pred_check_branch
        %1008 = sbr.rel (%p1006) target = $region72
      $region71: #{tpu_custom_call.1} parent=5 // pred_region
        %s1009 = ssub.s32 %s15, 2
      $region72: #{tpu_custom_call.1} parent=5 // pred_fallthru
        _
    $region6: #{tpu_custom_call.1} parent=1 // loop_footer
      %s19 = sadd.s32 1, %s15
    $region7: #{tpu_custom_call.1} parent=1 // loop_footer_branch
      %14 = sbr.rel target = $region3
    $region8: #{tpu_custom_call.1} parent=1 // loop_exit
      _
    %1010 = vsyncpa [#allocation4], 1
    %s1011 = scalar_lea.sflag [#allocation4], 1
    %1012 = vsyncpa %s1011, 1
    %1013 = vsyncpa [#allocation7], 1
    %1014 = vsyncpa [#allocation5], 1
    %s1015 = scalar_lea.sflag [#allocation5], 1
    %1016 = vsyncpa %s1015, 1

</llo_original>
